<compile_context>
chip_gen: v7x
topology: tpu7x:2x2x1
jax: 0.10.0
libtpu: 0.0.40
codegen_flags: <defaults>
</compile_context>

<pallas_src>
import jax
import jax.numpy as jnp
from jax.experimental import pallas as pl
from jax.experimental.pallas import tpu as pltpu

_NEG_LARGE = -1e30  # finite "minus infinity": avoids inf - inf -> NaN


def _luong_attention_kernel(q_ref, keys_ref, w_ref, mask_ref, vals_ref,
                            ctx_ref, alpha_ref,
                            projq_sc, m_sc, l_sc, acc_sc):
    s_idx = pl.program_id(1)
    last_s = pl.num_programs(1) - 1

    ts = keys_ref.shape[1]           # source tile length (static)
    S_pad = alpha_ref.shape[2]       # full (padded) source length (static)
    multi_tile = ts != S_pad         # static Python bool
    cdt = projq_sc.dtype             # MXU compute dtype (bf16 or f32)

    # ---- per-batch-block init: query projection + online-softmax state ------
    @pl.when(s_idx == 0)
    def _init():
        # proj_q = query @ W  (rewrite of q @ (keys @ W^T)^T: project the M
        # query rows once per batch block instead of the S key rows).
        pq = jnp.einsum('bmh,hk->bmk',
                        q_ref[...].astype(cdt), w_ref[...].astype(cdt),
                        preferred_element_type=jnp.float32)
        projq_sc[...] = pq.astype(cdt)
        m_sc[...] = jnp.full_like(m_sc, -jnp.inf)
        l_sc[...] = jnp.zeros_like(l_sc)
        acc_sc[...] = jnp.zeros_like(acc_sc)
        if multi_tile:
            alpha_ref[...] = jnp.zeros_like(alpha_ref)

    keys = keys_ref[...].astype(cdt)          # (bb, ts, K)
    vals = vals_ref[...].astype(cdt)          # (bb, ts, V)
    mask = mask_ref[...]                      # (bb, M, ts) int

    # scores tile = proj_q @ keys^T, f32 accumulation on the MXU.
    # TODO(synk): if the Mosaic MLIR shows a per-step vxpose of the (ts, K) keys
    # tile feeding this einsum, pre-lay keys out as (B, K, S) in the caller
    # (worth it when keys are reused across decode steps, like proj_keys).
    scores = jnp.einsum('bmk,bsk->bms', projq_sc[...], keys,
                        preferred_element_type=jnp.float32)
    scores = jnp.where(mask != 0, scores, jnp.float32(_NEG_LARGE))

    # ---- online (flash-style) softmax update over the source axis -----------
    m_prev = m_sc[...]                                          # (bb, M, 1)
    m_new = jnp.maximum(m_prev, jnp.max(scores, axis=-1, keepdims=True))
    a = jnp.exp(m_prev - m_new)                                 # correction
    p = jnp.exp(scores - m_new)                                 # (bb, M, ts) f32

    l_sc[...] = a * l_sc[...] + jnp.sum(p, axis=-1, keepdims=True)
    acc_sc[...] = a * acc_sc[...] + jnp.einsum(
        'bms,bsv->bmv', p.astype(cdt), vals,
        preferred_element_type=jnp.float32)
    m_sc[...] = m_new

    # Unnormalized alphas accumulate in the resident output block: rescale the
    # already-written prefix by the correction factor, drop the new tile in.
    p_out = p.astype(alpha_ref.dtype)
    if multi_tile:
        alpha_ref[...] = (alpha_ref[...] * a).astype(alpha_ref.dtype)
        start = pl.multiple_of(s_idx * ts, ts)                  # 128-aligned
        alpha_ref[:, :, pl.ds(start, ts)] = p_out
    else:
        alpha_ref[...] = p_out

    # ---- finalize: normalize alphas, emit context ----------------------------
    @pl.when(s_idx == last_s)
    def _finalize():
        inv_l = pl.reciprocal(l_sc[...], approx=True)           # EUP slot
        ctx_ref[...] = (acc_sc[...] * inv_l).astype(ctx_ref.dtype)
        alpha_ref[...] = (alpha_ref[...] * inv_l).astype(alpha_ref.dtype)


def _default_vmem_limit_bytes():
    # ~96 MiB on v5e/v6e (128 MiB physical), ~48 MiB on v7x (64 MiB physical);
    # leaves pipeline headroom above the 16/32 MiB scoped default.
    try:
        cap = pltpu.get_tpu_info().vmem_capacity_bytes
        if not cap:
            return None
        return int(cap) * 3 // 4
    except Exception:
        return None


def luong_attention(query, keys, values, mask, w_key, *,
                    compute_dtype=jnp.bfloat16,
                    batch_block=None,
                    s_block=512,
                    alphas_dtype=jnp.float32,
                    vmem_limit_bytes=None):
    """query:[B,M,H] keys:[B,S,K] values:[B,S,V] mask:[B,M,S] w_key:[H,K]

    Returns (context [B,M,V] in query.dtype, alphas [B,M,S] in alphas_dtype).
    alphas_dtype=jnp.bfloat16 halves the largest HBM writeback if the caller
    only needs coarse attention weights.
    """
    B, M, H = query.shape
    _, S, K = keys.shape
    V = values.shape[-1]
    assert mask.shape == (B, M, S), "mask must be [B, M, S] (pre-broadcast it)"
    assert w_key.shape == (H, K)

    # ---- batch blocking: biggest bb that still leaves >=2 parallel grid steps
    # (keeps both v7x TensorCores busy); sweep 2/4/8 for your production B.
    if batch_block is None:
        batch_block = 1
        for cand in (8, 4, 2):
            if B % cand == 0 and B // cand >= 2:
                batch_block = cand
                break
    bb = batch_block
    assert B % bb == 0, "batch_block must divide batch size"

    # ---- source tiling for the online softmax --------------------------------
    if S <= s_block:
        ts, num_s, S_pad = S, 1, S          # single tile: no padding, no slice
    else:
        assert s_block % 128 == 0, "s_block must be a multiple of 128"
        ts = s_block
        num_s = pl.cdiv(S, ts)
        S_pad = ts * num_s

    # bool masks lower more robustly as int8 (same 1 byte/elem of HBM traffic).
    if mask.dtype == jnp.bool_:
        mask = mask.astype(jnp.int8)

    k_in, v_in, m_in = keys, values, mask
    if S_pad != S:
        # Ragged-S fallback only; production callers should bucket S to a
        # multiple of s_block so this pad (and the alphas slice below) never runs.
        k_in = jnp.pad(k_in, ((0, 0), (0, S_pad - S), (0, 0)))
        v_in = jnp.pad(v_in, ((0, 0), (0, S_pad - S), (0, 0)))
        m_in = jnp.pad(m_in, ((0, 0), (0, 0), (0, S_pad - S)))   # pad = masked out

    grid_spec = pltpu.PrefetchScalarGridSpec(
        num_scalar_prefetch=0,
        grid=(B // bb, num_s),
        in_specs=[
            pl.BlockSpec((bb, M, H),  lambda b, s: (b, 0, 0)),   # query (resident over s)
            pl.BlockSpec((bb, ts, K), lambda b, s: (b, s, 0)),   # keys tile
            # W_key: constant block index -> DMA'd once.  TODO(synk): for very
            # large (H, K) on v7x, load it via a manual DMA into persistent
            # scratch to avoid reserving a second pipeline buffer.
            pl.BlockSpec((H, K),      lambda b, s: (0, 0)),
            pl.BlockSpec((bb, M, ts), lambda b, s: (b, 0, s)),   # mask tile
            pl.BlockSpec((bb, ts, V), lambda b, s: (b, s, 0)),   # values tile
        ],
        out_specs=[
            pl.BlockSpec((bb, M, V),     lambda b, s: (b, 0, 0)),  # context
            pl.BlockSpec((bb, M, S_pad), lambda b, s: (b, 0, 0)),  # alphas (resident)
        ],
        scratch_shapes=[
            pltpu.VMEM((bb, M, K), compute_dtype),   # projected query
            pltpu.VMEM((bb, M, 1), jnp.float32),     # running max
            pltpu.VMEM((bb, M, 1), jnp.float32),     # running sum
            pltpu.VMEM((bb, M, V), jnp.float32),     # context accumulator
        ],
    )

    cp_kwargs = dict(dimension_semantics=("parallel", "arbitrary"))
    if vmem_limit_bytes is None:
        vmem_limit_bytes = _default_vmem_limit_bytes()
    if vmem_limit_bytes is not None:
        cp_kwargs["vmem_limit_bytes"] = int(vmem_limit_bytes)

    ctx, alphas = pl.pallas_call(
        _luong_attention_kernel,
        out_shape=(
            jax.ShapeDtypeStruct((B, M, V), query.dtype),
            jax.ShapeDtypeStruct((B, M, S_pad), alphas_dtype),
        ),
        grid_spec=grid_spec,
        compiler_params=pltpu.CompilerParams(**cp_kwargs),
    )(query, k_in, w_key, m_in, v_in)

    if S_pad != S:
        alphas = alphas[..., :S]
    return ctx, alphas


def luong_attention_ref(query, keys, values, mask, w_key):
    proj_keys = jnp.einsum("bsk,hk->bsh", keys, w_key)
    scores = jnp.einsum("bmh,bsh->bms", query, proj_keys)
    scores = jnp.where(mask != 0, scores, -jnp.inf)
    alphas = jax.nn.softmax(scores, axis=-1)
    context = jnp.einsum("bms,bsv->bmv", alphas, values)
    return context, alphas


if __name__ == "__main__":
    def make_inputs(B, M, S, H, K, V, seed=0):
        key = jax.random.PRNGKey(seed if seed else 0)
        kq, kk, kv, kw, km = jax.random.split(key, 5)
        query = jax.random.normal(kq, (B, M, H), dtype=jnp.float32)
        keys = jax.random.normal(kk, (B, S, K), dtype=jnp.float32)
        values = jax.random.normal(kv, (B, S, V), dtype=jnp.float32)
        # deterministic "nn.Linear(key_size, hidden_size, bias=False)" weight
        w_key = jax.random.uniform(kw, (H, K), dtype=jnp.float32,
                                   minval=-1.0 / (K ** 0.5), maxval=1.0 / (K ** 0.5))
        # int8 source mask, at least position 0 valid per row (fully-masked rows
        # are NaN in the reference; here they'd be uniform — see header note).
        mask = (jax.random.uniform(km, (B, M, S)) > 0.3).astype(jnp.int8)
        mask = mask.at[:, :, 0].set(1)
        return query, keys, values, mask, w_key

    # 1) small single-S-tile shapes, f32 MXU path (v5e-friendly, near-exact)
    q, k, v, m, w = make_inputs(2, 8, 16, 32, 32, 32, seed=0)
    ctx_r, alp_r = luong_attention_ref(q, k, v, m, w)
    ctx, alp = luong_attention(q, k, v, m, w, compute_dtype=jnp.float32)
    jax.block_until_ready((ctx, alp))
    assert jnp.allclose(alp, alp_r, atol=5e-3, rtol=5e-3)
    assert jnp.allclose(ctx, ctx_r, atol=5e-3, rtol=5e-3)

    # 2) same shapes, bf16 MXU path (v6e/v7x preferred; softmax/accum stay f32)
    ctxb, alpb = luong_attention(q, k, v, m, w, compute_dtype=jnp.bfloat16)
    jax.block_until_ready((ctxb, alpb))
    assert jnp.allclose(alpb, alp_r, atol=1e-1, rtol=1e-1)
    assert jnp.allclose(ctxb, ctx_r, atol=1e-1, rtol=1e-1)

    # 3) multi-tile S (online softmax across 2 source tiles), f32
    q, k, v, m, w = make_inputs(2, 8, 256, 32, 32, 32, seed=1)
    ctx_r, alp_r = luong_attention_ref(q, k, v, m, w)
    ctx, alp = luong_attention(q, k, v, m, w, compute_dtype=jnp.float32,
                               s_block=128)
    jax.block_until_ready((ctx, alp))
    assert jnp.allclose(alp, alp_r, atol=1e-2, rtol=1e-2)
    assert jnp.allclose(ctx, ctx_r, atol=1e-2, rtol=1e-2)

    # 4) ragged S fallback (S=200 -> padded to 256, 2 tiles, output sliced), f32
    q, k, v, m, w = make_inputs(2, 8, 200, 32, 32, 32, seed=2)
    ctx_r, alp_r = luong_attention_ref(q, k, v, m, w)
    ctx, alp = luong_attention(q, k, v, m, w, compute_dtype=jnp.float32,
                               s_block=128)
    jax.block_until_ready((ctx, alp))
    assert jnp.allclose(alp, alp_r, atol=1e-2, rtol=1e-2)
    assert jnp.allclose(ctx, ctx_r, atol=1e-2, rtol=1e-2)

    print("KERNEL_OK")
</pallas_src>

<mosaic_0001>
module attributes {stable_mosaic.version = 11 : i64} {
  func.func @_luong_attention_kernel(%arg0: i32, %arg1: i32, %arg2: memref<1x8x32xf32, #tpu.memory_space<vmem>>, %arg3: memref<1x16x32xf32, #tpu.memory_space<vmem>>, %arg4: memref<32x32xf32, #tpu.memory_space<vmem>>, %arg5: memref<1x8x16xi8, #tpu.memory_space<vmem>>, %arg6: memref<1x16x32xf32, #tpu.memory_space<vmem>>, %arg7: memref<1x8x32xf32, #tpu.memory_space<vmem>>, %arg8: memref<1x8x16xf32, #tpu.memory_space<vmem>>, %arg9: memref<1x8x32xf32, #tpu.memory_space<vmem>>, %arg10: memref<1x8x1xf32, #tpu.memory_space<vmem>>, %arg11: memref<1x8x1xf32, #tpu.memory_space<vmem>>, %arg12: memref<1x8x32xf32, #tpu.memory_space<vmem>>) attributes {dimension_semantics = [#tpu.dimension_semantics<parallel>, #tpu.dimension_semantics<arbitrary>], iteration_bounds = array<i64: 2, 1>, scalar_prefetch = 0 : i64, scratch_operands = 4 : i64, tpu.core_type = #tpu.core_type<tc>, window_params = [{transform_indices = @transform_0, window_bounds = array<i64: 1, 8, 32>}, {transform_indices = @transform_1, window_bounds = array<i64: 1, 16, 32>}, {pipeline_mode = #tpu.pipeline_mode<synchronous>, transform_indices = @transform_2, window_bounds = array<i64: 32, 32>}, {transform_indices = @transform_3, window_bounds = array<i64: 1, 8, 16>}, {transform_indices = @transform_4, window_bounds = array<i64: 1, 16, 32>}, {transform_indices = @transform_5, window_bounds = array<i64: 1, 8, 32>}, {transform_indices = @transform_6, window_bounds = array<i64: 1, 8, 16>}]} {
    %c0_i32 = arith.constant 0 : i32
    %0 = arith.cmpi eq, %arg1, %c0_i32 : i32
    %1 = arith.extui %0 : i1 to i32
    %c0_i32_0 = arith.constant 0 : i32
    %2 = arith.cmpi ne, %1, %c0_i32_0 : i32
    scf.if %2 {
      %c0_39 = arith.constant 0 : index
      %c0_40 = arith.constant 0 : index
      %c0_41 = arith.constant 0 : index
      %38 = vector.load %arg2[%c0_39, %c0_40, %c0_41] : memref<1x8x32xf32, #tpu.memory_space<vmem>>, vector<1x8x32xf32>
      %c0_42 = arith.constant 0 : index
      %c0_43 = arith.constant 0 : index
      %39 = vector.load %arg4[%c0_42, %c0_43] : memref<32x32xf32, #tpu.memory_space<vmem>>, vector<32x32xf32>
      "tpu.trace_start"() <{level = 10 : i32, message = "bmh,hk->bmk"}> : () -> ()
      %cst_44 = arith.constant dense<0.000000e+00> : vector<1x8x32xf32>
      %40 = tpu.matmul %38, %39, %cst_44 {dimension_numbers = #tpu.dot_dimension_numbers<[2], [0], [0, 1], [1], [0, 0, 0, 1, 1, 1], [], []>} : vector<1x8x32xf32>, vector<32x32xf32>, vector<1x8x32xf32> -> vector<1x8x32xf32>
      "tpu.trace_stop"() : () -> ()
      %c0_45 = arith.constant 0 : index
      %c0_46 = arith.constant 0 : index
      %c0_47 = arith.constant 0 : index
      %41 = vector.load %arg9[%c0_45, %c0_46, %c0_47] : memref<1x8x32xf32, #tpu.memory_space<vmem>>, vector<1x8x32xf32>
      tpu.vector_store %arg9[%c0_45, %c0_46, %c0_47], %40 {strides = array<i32>} : memref<1x8x32xf32, #tpu.memory_space<vmem>>, vector<1x8x32xf32>,
      %cst_48 = arith.constant 0xFF800000 : f32
      %42 = vector.broadcast %cst_48 : f32 to vector<1x8x1xf32>
      %c0_49 = arith.constant 0 : index
      %c0_50 = arith.constant 0 : index
      %c0_51 = arith.constant 0 : index
      %43 = vector.load %arg10[%c0_49, %c0_50, %c0_51] : memref<1x8x1xf32, #tpu.memory_space<vmem>>, vector<1x8x1xf32>
      tpu.vector_store %arg10[%c0_49, %c0_50, %c0_51], %42 {strides = array<i32>} : memref<1x8x1xf32, #tpu.memory_space<vmem>>, vector<1x8x1xf32>,
      %cst_52 = arith.constant 0.000000e+00 : f32
      %44 = vector.broadcast %cst_52 : f32 to vector<1x8x1xf32>
      %c0_53 = arith.constant 0 : index
      %c0_54 = arith.constant 0 : index
      %c0_55 = arith.constant 0 : index
      %45 = vector.load %arg11[%c0_53, %c0_54, %c0_55] : memref<1x8x1xf32, #tpu.memory_space<vmem>>, vector<1x8x1xf32>
      tpu.vector_store %arg11[%c0_53, %c0_54, %c0_55], %44 {strides = array<i32>} : memref<1x8x1xf32, #tpu.memory_space<vmem>>, vector<1x8x1xf32>,
      %cst_56 = arith.constant 0.000000e+00 : f32
      %46 = vector.broadcast %cst_56 : f32 to vector<1x8x32xf32>
      %c0_57 = arith.constant 0 : index
      %c0_58 = arith.constant 0 : index
      %c0_59 = arith.constant 0 : index
      %47 = vector.load %arg12[%c0_57, %c0_58, %c0_59] : memref<1x8x32xf32, #tpu.memory_space<vmem>>, vector<1x8x32xf32>
      tpu.vector_store %arg12[%c0_57, %c0_58, %c0_59], %46 {strides = array<i32>} : memref<1x8x32xf32, #tpu.memory_space<vmem>>, vector<1x8x32xf32>,
    } else {
    }
    %c0 = arith.constant 0 : index
    %c0_1 = arith.constant 0 : index
    %c0_2 = arith.constant 0 : index
    %3 = vector.load %arg3[%c0, %c0_1, %c0_2] : memref<1x16x32xf32, #tpu.memory_space<vmem>>, vector<1x16x32xf32>
    %c0_3 = arith.constant 0 : index
    %c0_4 = arith.constant 0 : index
    %c0_5 = arith.constant 0 : index
    %4 = vector.load %arg6[%c0_3, %c0_4, %c0_5] : memref<1x16x32xf32, #tpu.memory_space<vmem>>, vector<1x16x32xf32>
    %c0_6 = arith.constant 0 : index
    %c0_7 = arith.constant 0 : index
    %c0_8 = arith.constant 0 : index
    %5 = vector.load %arg5[%c0_6, %c0_7, %c0_8] : memref<1x8x16xi8, #tpu.memory_space<vmem>>, vector<1x8x16xi8>
    %c0_9 = arith.constant 0 : index
    %c0_10 = arith.constant 0 : index
    %c0_11 = arith.constant 0 : index
    %6 = vector.load %arg9[%c0_9, %c0_10, %c0_11] : memref<1x8x32xf32, #tpu.memory_space<vmem>>, vector<1x8x32xf32>
    "tpu.trace_start"() <{level = 10 : i32, message = "bmk,bsk->bms"}> : () -> ()
    %cst = arith.constant dense<0.000000e+00> : vector<1x8x16xf32>
    %7 = tpu.matmul %6, %3, %cst {dimension_numbers = #tpu.dot_dimension_numbers<[2], [2], [1], [1], [0, 0, 0, 1, 1, 1], [0], [0]>} : vector<1x8x32xf32>, vector<1x16x32xf32>, vector<1x8x16xf32> -> vector<1x8x16xf32>
    %c0_i8 = arith.constant 0 : i8
    "tpu.trace_stop"() : () -> ()
    %8 = vector.broadcast %c0_i8 : i8 to vector<1x8x16xi8>
    %9 = arith.cmpi ne, %5, %8 : vector<1x8x16xi8>
    %cst_12 = arith.constant -1.000000e+30 : f32
    %10 = vector.broadcast %cst_12 : f32 to vector<1x8x16xf32>
    %11 = arith.select %9, %7, %10 : vector<1x8x16xi1>, vector<1x8x16xf32>
    %c0_13 = arith.constant 0 : index
    %c0_14 = arith.constant 0 : index
    %c0_15 = arith.constant 0 : index
    %12 = vector.load %arg10[%c0_13, %c0_14, %c0_15] : memref<1x8x1xf32, #tpu.memory_space<vmem>>, vector<1x8x1xf32>
    %cst_16 = arith.constant dense<0xFF800000> : vector<1x8xf32>
    %13 = vector.multi_reduction <maximumf>, %11, %cst_16 [2] : vector<1x8x16xf32> to vector<1x8xf32>
    %14 = vector.shape_cast %13 : vector<1x8xf32> to vector<1x8x1xf32>
    %15 = arith.maximumf %12, %14 : vector<1x8x1xf32>
    %16 = arith.subf %12, %15 : vector<1x8x1xf32>
    %17 = math.exp %16 : vector<1x8x1xf32>
    %18 = vector.broadcast %15 : vector<1x8x1xf32> to vector<1x8x16xf32>
    %19 = arith.subf %11, %18 : vector<1x8x16xf32>
    %20 = math.exp %19 : vector<1x8x16xf32>
    %c0_17 = arith.constant 0 : index
    %c0_18 = arith.constant 0 : index
    %c0_19 = arith.constant 0 : index
    %21 = vector.load %arg11[%c0_17, %c0_18, %c0_19] : memref<1x8x1xf32, #tpu.memory_space<vmem>>, vector<1x8x1xf32>
    %22 = arith.mulf %17, %21 : vector<1x8x1xf32>
    %cst_20 = arith.constant dense<0.000000e+00> : vector<1x8xf32>
    %23 = vector.multi_reduction <add>, %20, %cst_20 [2] : vector<1x8x16xf32> to vector<1x8xf32>
    %24 = vector.shape_cast %23 : vector<1x8xf32> to vector<1x8x1xf32>
    %25 = arith.addf %22, %24 : vector<1x8x1xf32>
    %c0_21 = arith.constant 0 : index
    %c0_22 = arith.constant 0 : index
    %c0_23 = arith.constant 0 : index
    %26 = vector.load %arg11[%c0_21, %c0_22, %c0_23] : memref<1x8x1xf32, #tpu.memory_space<vmem>>, vector<1x8x1xf32>
    tpu.vector_store %arg11[%c0_21, %c0_22, %c0_23], %25 {strides = array<i32>} : memref<1x8x1xf32, #tpu.memory_space<vmem>>, vector<1x8x1xf32>,
    %c0_24 = arith.constant 0 : index
    %c0_25 = arith.constant 0 : index
    %c0_26 = arith.constant 0 : index
    %27 = vector.load %arg12[%c0_24, %c0_25, %c0_26] : memref<1x8x32xf32, #tpu.memory_space<vmem>>, vector<1x8x32xf32>
    %28 = vector.broadcast %17 : vector<1x8x1xf32> to vector<1x8x32xf32>
    %29 = arith.mulf %28, %27 : vector<1x8x32xf32>
    "tpu.trace_start"() <{level = 10 : i32, message = "bms,bsv->bmv"}> : () -> ()
    %cst_27 = arith.constant dense<0.000000e+00> : vector<1x8x32xf32>
    %30 = tpu.matmul %20, %4, %cst_27 {dimension_numbers = #tpu.dot_dimension_numbers<[2], [1], [1], [2], [0, 0, 0, 1, 1, 2], [0], [0]>} : vector<1x8x16xf32>, vector<1x16x32xf32>, vector<1x8x32xf32> -> vector<1x8x32xf32>
    "tpu.trace_stop"() : () -> ()
    %31 = arith.addf %29, %30 : vector<1x8x32xf32>
    %c0_28 = arith.constant 0 : index
    %c0_29 = arith.constant 0 : index
    %c0_30 = arith.constant 0 : index
    %32 = vector.load %arg12[%c0_28, %c0_29, %c0_30] : memref<1x8x32xf32, #tpu.memory_space<vmem>>, vector<1x8x32xf32>
    tpu.vector_store %arg12[%c0_28, %c0_29, %c0_30], %31 {strides = array<i32>} : memref<1x8x32xf32, #tpu.memory_space<vmem>>, vector<1x8x32xf32>,
    %c0_31 = arith.constant 0 : index
    %c0_32 = arith.constant 0 : index
    %c0_33 = arith.constant 0 : index
    %33 = vector.load %arg10[%c0_31, %c0_32, %c0_33] : memref<1x8x1xf32, #tpu.memory_space<vmem>>, vector<1x8x1xf32>
    tpu.vector_store %arg10[%c0_31, %c0_32, %c0_33], %15 {strides = array<i32>} : memref<1x8x1xf32, #tpu.memory_space<vmem>>, vector<1x8x1xf32>,
    %c0_34 = arith.constant 0 : index
    %c0_35 = arith.constant 0 : index
    %c0_36 = arith.constant 0 : index
    %34 = vector.load %arg8[%c0_34, %c0_35, %c0_36] : memref<1x8x16xf32, #tpu.memory_space<vmem>>, vector<1x8x16xf32>
    tpu.vector_store %arg8[%c0_34, %c0_35, %c0_36], %20 {strides = array<i32>} : memref<1x8x16xf32, #tpu.memory_space<vmem>>, vector<1x8x16xf32>,
    %c0_i32_37 = arith.constant 0 : i32
    %35 = arith.cmpi eq, %arg1, %c0_i32_37 : i32
    %36 = arith.extui %35 : i1 to i32
    %c0_i32_38 = arith.constant 0 : i32
    %37 = arith.cmpi ne, %36, %c0_i32_38 : i32
    scf.if %37 {
      %c0_39 = arith.constant 0 : index
      %c0_40 = arith.constant 0 : index
      %c0_41 = arith.constant 0 : index
      %38 = vector.load %arg11[%c0_39, %c0_40, %c0_41] : memref<1x8x1xf32, #tpu.memory_space<vmem>>, vector<1x8x1xf32>
      %39 = tpu.reciprocal %38 {approx = true} : vector<1x8x1xf32> -> vector<1x8x1xf32>
      %c0_42 = arith.constant 0 : index
      %c0_43 = arith.constant 0 : index
      %c0_44 = arith.constant 0 : index
      %40 = vector.load %arg12[%c0_42, %c0_43, %c0_44] : memref<1x8x32xf32, #tpu.memory_space<vmem>>, vector<1x8x32xf32>
      %41 = vector.broadcast %39 : vector<1x8x1xf32> to vector<1x8x32xf32>
      %42 = arith.mulf %40, %41 : vector<1x8x32xf32>
      %c0_45 = arith.constant 0 : index
      %c0_46 = arith.constant 0 : index
      %c0_47 = arith.constant 0 : index
      %43 = vector.load %arg7[%c0_45, %c0_46, %c0_47] : memref<1x8x32xf32, #tpu.memory_space<vmem>>, vector<1x8x32xf32>
      tpu.vector_store %arg7[%c0_45, %c0_46, %c0_47], %42 {strides = array<i32>} : memref<1x8x32xf32, #tpu.memory_space<vmem>>, vector<1x8x32xf32>,
      %c0_48 = arith.constant 0 : index
      %c0_49 = arith.constant 0 : index
      %c0_50 = arith.constant 0 : index
      %44 = vector.load %arg8[%c0_48, %c0_49, %c0_50] : memref<1x8x16xf32, #tpu.memory_space<vmem>>, vector<1x8x16xf32>
      %45 = vector.broadcast %39 : vector<1x8x1xf32> to vector<1x8x16xf32>
      %46 = arith.mulf %44, %45 : vector<1x8x16xf32>
      %c0_51 = arith.constant 0 : index
      %c0_52 = arith.constant 0 : index
      %c0_53 = arith.constant 0 : index
      %47 = vector.load %arg8[%c0_51, %c0_52, %c0_53] : memref<1x8x16xf32, #tpu.memory_space<vmem>>, vector<1x8x16xf32>
      tpu.vector_store %arg8[%c0_51, %c0_52, %c0_53], %46 {strides = array<i32>} : memref<1x8x16xf32, #tpu.memory_space<vmem>>, vector<1x8x16xf32>,
    } else {
    }
    return
  }
  func.func @transform_0(%arg0: i32, %arg1: i32) -> (i32, i32, i32) {
    %c0_i32 = arith.constant 0 : i32
    %c0_i32_0 = arith.constant 0 : i32
    %c0_i32_1 = arith.constant 0 : i32
    return %arg0, %c0_i32, %c0_i32_0 : i32, i32, i32
  }
  func.func @transform_1(%arg0: i32, %arg1: i32) -> (i32, i32, i32) {
    %c0_i32 = arith.constant 0 : i32
    %c0_i32_0 = arith.constant 0 : i32
    return %arg0, %arg1, %c0_i32 : i32, i32, i32
  }
  func.func @transform_2(%arg0: i32, %arg1: i32) -> (i32, i32) {
    %c0_i32 = arith.constant 0 : i32
    %c0_i32_0 = arith.constant 0 : i32
    %c0_i32_1 = arith.constant 0 : i32
    return %c0_i32, %c0_i32_0 : i32, i32
  }
  func.func @transform_3(%arg0: i32, %arg1: i32) -> (i32, i32, i32) {
    %c0_i32 = arith.constant 0 : i32
    %c0_i32_0 = arith.constant 0 : i32
    return %arg0, %c0_i32, %arg1 : i32, i32, i32
  }
  func.func @transform_4(%arg0: i32, %arg1: i32) -> (i32, i32, i32) {
    %c0_i32 = arith.constant 0 : i32
    %c0_i32_0 = arith.constant 0 : i32
    return %arg0, %arg1, %c0_i32 : i32, i32, i32
  }
  func.func @transform_5(%arg0: i32, %arg1: i32) -> (i32, i32, i32) {
    %c0_i32 = arith.constant 0 : i32
    %c0_i32_0 = arith.constant 0 : i32
    %c0_i32_1 = arith.constant 0 : i32
    return %arg0, %c0_i32, %c0_i32_0 : i32, i32, i32
  }
  func.func @transform_6(%arg0: i32, %arg1: i32) -> (i32, i32, i32) {
    %c0_i32 = arith.constant 0 : i32
    %c0_i32_0 = arith.constant 0 : i32
    %c0_i32_1 = arith.constant 0 : i32
    return %arg0, %c0_i32, %c0_i32_0 : i32, i32, i32
  }
}

</mosaic_0001>

<llo_original>
// kernel: tpu_custom_call.1
$region0: #{tpu_custom_call.1}
  #allocation0 [shape = 'u32[]', space=smem, size = 0x4, offset = 0x4, fixed_abs, tag = 'smem constant byte address 0x4 - core index']
  #allocation1 [shape = 'u32[144,128]{1,0:T(1,128)}', space=vmem, size = 0x12000, scoped, tag = 'internal scratch']
  #allocation2 [shape = 'f32[1,8,32]{2,1,0:T(8,128)}', space=vmem, size = 0x1000, scoped, tag = 'scratch operand']
  #allocation3 [shape = 'f32[1,8,1]{2,1,0:T(8,128)}', space=vmem, size = 0x1000, scoped, tag = 'scratch operand']
  #allocation4 [shape = 'f32[1,8,1]{2,1,0:T(8,128)}', space=vmem, size = 0x1000, scoped, tag = 'scratch operand']
  #allocation5 [shape = 'f32[1,8,32]{2,1,0:T(8,128)}', space=vmem, size = 0x1000, scoped, tag = 'scratch operand']
  %s0 = inlined_call_operand.hbm [shape: f32[2,8,32], index: 0, kind: input, shape index: {}]
  %s1 = inlined_call_operand.hbm [shape: f32[2,16,32], index: 1, kind: input, shape index: {}]
  %s2 = inlined_call_operand.hbm [shape: f32[32,32], index: 2, kind: input, shape index: {}]
  %s3 = inlined_call_operand.vmem [shape: s8[2,8,16], index: 3, kind: input, shape index: {}]
  %s4 = inlined_call_operand.hbm [shape: f32[2,16,32], index: 4, kind: input, shape index: {}]
  %s5 = inlined_call_operand.hbm [shape: f32[2,8,32], index: 5, kind: output, shape index: {0}]
  %s6 = inlined_call_operand.hbm [shape: f32[2,8,16], index: 6, kind: output, shape index: {1}]
  %7 = xla_tuple %s5, %s6
  %s8 = sld [smem:[#allocation0]]
  $region85: #{tpu_custom_call.1} parent=0
    _
  %s10 = ssub.s32 1, %s8
  %s11 = scalar_select 0, %s10, %s8
  $region1: #{tpu_custom_call.1} parent=0
    #allocation6 [shape = 'u8[8192]{0}', space=vmem, size = 0x2000, scoped, tag = 'input window, operand 0']
    #allocation7 [shape = 's32[2]{0}', space=sflag, size = 0x8, scoped, tag = 'scoped memory for tpu_custom_call.1']
    #allocation8 [shape = 's32[2]{0}', space=sflag, size = 0x8, scoped, tag = 'scoped memory for tpu_custom_call.1']
    #allocation9 [shape = 'u8[16384]{0}', space=vmem, size = 0x4000, scoped, tag = 'input window, operand 1']
    #allocation10 [shape = 's32[2]{0}', space=sflag, size = 0x8, scoped, tag = 'scoped memory for tpu_custom_call.1']
    #allocation11 [shape = 'u8[16384]{0}', space=vmem, size = 0x4000, scoped, tag = 'input window, operand 2, single buffered']
    #allocation12 [shape = 'u8[16384]{0}', space=vmem, size = 0x4000, scoped, tag = 'input window, operand 4']
    #allocation13 [shape = 's32[2]{0}', space=sflag, size = 0x8, scoped, tag = 'scoped memory for tpu_custom_call.1']
    #allocation14 [shape = 'u8[8192]{0}', space=vmem, size = 0x2000, scoped, tag = 'output window, operand 0']
    #allocation15 [shape = 'u8[8192]{0}', space=vmem, size = 0x2000, scoped, tag = 'output window, operand 1']
    #allocation16 [shape = 's32[2]{0}', space=sflag, size = 0x8, scoped, tag = 'scoped memory for tpu_custom_call.1']
    %12 = vsyncpa [#allocation7], 0
    %s13 = scalar_lea.sflag [#allocation7], 1
    %14 = vsyncpa %s13, 0
    %15 = vsyncpa [#allocation10], 0
    %s16 = scalar_lea.sflag [#allocation10], 1
    %17 = vsyncpa %s16, 0
    %18 = vsyncpa [#allocation13], 0
    %s19 = scalar_lea.sflag [#allocation13], 1
    %20 = vsyncpa %s19, 0
    %21 = vsyncpa [#allocation8], 0
    %s22 = scalar_lea.sflag [#allocation8], 1
    %23 = vsyncpa %s22, 0
    %24 = vsyncpa [#allocation16], 0
    %s25 = scalar_lea.sflag [#allocation16], 1
    %26 = vsyncpa %s25, 0
    loop: start=0, step=1, limit=4
    $region2: #{tpu_custom_call.1} parent=1 // loop_pre_header
      _
    $region3: #{tpu_custom_call.1} parent=1 // loop_header
      %s28 = sphi 0, %s32
      %p29 = scmp.ge.s32.totalorder %s28, 4
      %s35 = sphi 0, %s47
      %s36 = sphi 0, %s43
      %s37 = sphi 0, %s35
      %s38 = sphi 0, %s36
      %s39 = sphi 0, %s37
      %s40 = sphi 0, %s38
      %s50 = sphi 0, %s52
      %s53 = sphi 0, %s50
      %s54 = sphi 0, %s53
      %s70 = sphi 0, %s54
      %s78 = sphi 0, %s80
      %s81 = sphi 0, %s78
      %s82 = sphi 0, %s81
      %s98 = sphi 0, %s82
      %s102 = sphi 0, %s102
      %s104 = sphi 0, %s102
      %s105 = sphi 0, %s104
      %s119 = sphi 0, %s105
      %s127 = sphi 0, %s129
      %s130 = sphi 0, %s127
      %s131 = sphi 0, %s130
      %s147 = sphi 0, %s131
      %s155 = sphi 0, %s157
      %s158 = sphi 0, %s155
      %s159 = sphi 0, %s158
      %s175 = sphi 0, %s159
      %s181 = sphi 0, %s183
      %s184 = sphi 0, %s181
      %s185 = sphi 0, %s184
      %s201 = sphi 0, %s185
      %s207 = sphi 0, %s209
      %s210 = sphi 0, %s207
      %s211 = sphi 0, %s210
      %s227 = sphi 0, %s211
    $region4: #{tpu_custom_call.1} parent=1 // loop_header_branch
      %31 = sbr.rel (%p29) target = $region8
    $region5: #{tpu_custom_call.1} parent=1 // loop_body
      %s33 = ssub.s32 %s28, 1
      %s34 = ssub.s32 %s28, 2
      %s41 = sadd.s32 1, %s36
      %p42 = scmp.ge.s32.totalorder %s41, 1
      %s43 = scalar_select %p42, 0, %s41
      %s44 = sadd.s32 1, %s35
      %s45 = scalar_select %p42, %s44, %s35
      %p46 = scmp.ge.s32.totalorder %s45, 2
      %s47 = scalar_select %p46, 0, %s45
      %s48 = ssub.s32 %s35, %s47
      %p49 = scmp.eq.s32.totalorder %s48, 0
      %s51 = sadd.s32 %s50, 1
      %s52 = scalar_select %p49, %s50, %s51
      %p55 = pneg %p49
      %p56 = scmp.eq.s32.totalorder %s28, 1
      %p57 = por %p55, %p56
      %p58 = scmp.ne.s32.totalorder %s50, %s53
      %p59 = scmp.eq.s32.totalorder %s28, 0
      %p60 = por %p58, %p59
      %p61 = scmp.ne.s32.totalorder %s50, %s53
      %p62 = scmp.eq.s32.totalorder %s33, 1
      %p63 = por %p61, %p62
      %p64 = scmp.ne.s32.totalorder %s53, %s54
      %p65 = scmp.eq.s32.totalorder %s33, 0
      %p66 = por %p64, %p65
      %p67 = scmp.ne.s32.totalorder %s53, %s54
      %p68 = scmp.eq.s32.totalorder %s34, 1
      %p69 = por %p67, %p68
      %p71 = scmp.ne.s32.totalorder %s54, %s70
      %p72 = scmp.eq.s32.totalorder %s34, 0
      %p73 = por %p71, %p72
      %s74 = ssub.s32 %s35, %s47
      %s75 = ssub.s32 %s36, %s43
      %s76 = sor.u32 %s74, %s75
      %p77 = scmp.eq.s32.totalorder %s76, 0
      %s79 = sadd.s32 %s78, 1
      %s80 = scalar_select %p77, %s78, %s79
      %p83 = pneg %p77
      %p84 = scmp.eq.s32.totalorder %s28, 1
      %p85 = por %p83, %p84
      %p86 = scmp.ne.s32.totalorder %s78, %s81
      %p87 = scmp.eq.s32.totalorder %s28, 0
      %p88 = por %p86, %p87
      %p89 = scmp.ne.s32.totalorder %s78, %s81
      %p90 = scmp.eq.s32.totalorder %s33, 1
      %p91 = por %p89, %p90
      %p92 = scmp.ne.s32.totalorder %s81, %s82
      %p93 = scmp.eq.s32.totalorder %s33, 0
      %p94 = por %p92, %p93
      %p95 = scmp.ne.s32.totalorder %s81, %s82
      %p96 = scmp.eq.s32.totalorder %s34, 1
      %p97 = por %p95, %p96
      %p99 = scmp.ne.s32.totalorder %s82, %s98
      %p100 = scmp.eq.s32.totalorder %s34, 0
      %p101 = por %p99, %p100
      %s103 = sadd.s32 %s102, 1
      %p106 = scmp.eq.s32.totalorder %s28, 1
      %p107 = scmp.ne.s32.totalorder %s102, %s104
      %p108 = scmp.eq.s32.totalorder %s28, 0
      %p109 = por %p107, %p108
      %p110 = scmp.ne.s32.totalorder %s102, %s104
      %p111 = scmp.eq.s32.totalorder %s33, 1
      %p112 = por %p110, %p111
      %p113 = scmp.ne.s32.totalorder %s104, %s105
      %p114 = scmp.eq.s32.totalorder %s33, 0
      %p115 = por %p113, %p114
      %p116 = scmp.ne.s32.totalorder %s104, %s105
      %p117 = scmp.eq.s32.totalorder %s34, 1
      %p118 = por %p116, %p117
      %p120 = scmp.ne.s32.totalorder %s105, %s119
      %p121 = scmp.eq.s32.totalorder %s34, 0
      %p122 = por %p120, %p121
      %s123 = ssub.s32 %s35, %s47
      %s124 = ssub.s32 %s36, %s43
      %s125 = sor.u32 %s123, %s124
      %p126 = scmp.eq.s32.totalorder %s125, 0
      %s128 = sadd.s32 %s127, 1
      %s129 = scalar_select %p126, %s127, %s128
      %p132 = pneg %p126
      %p133 = scmp.eq.s32.totalorder %s28, 1
      %p134 = por %p132, %p133
      %p135 = scmp.ne.s32.totalorder %s127, %s130
      %p136 = scmp.eq.s32.totalorder %s28, 0
      %p137 = por %p135, %p136
      %p138 = scmp.ne.s32.totalorder %s127, %s130
      %p139 = scmp.eq.s32.totalorder %s33, 1
      %p140 = por %p138, %p139
      %p141 = scmp.ne.s32.totalorder %s130, %s131
      %p142 = scmp.eq.s32.totalorder %s33, 0
      %p143 = por %p141, %p142
      %p144 = scmp.ne.s32.totalorder %s130, %s131
      %p145 = scmp.eq.s32.totalorder %s34, 1
      %p146 = por %p144, %p145
      %p148 = scmp.ne.s32.totalorder %s131, %s147
      %p149 = scmp.eq.s32.totalorder %s34, 0
      %p150 = por %p148, %p149
      %s151 = ssub.s32 %s35, %s47
      %s152 = ssub.s32 %s36, %s43
      %s153 = sor.u32 %s151, %s152
      %p154 = scmp.eq.s32.totalorder %s153, 0
      %s156 = sadd.s32 %s155, 1
      %s157 = scalar_select %p154, %s155, %s156
      %p160 = pneg %p154
      %p161 = scmp.eq.s32.totalorder %s28, 1
      %p162 = por %p160, %p161
      %p163 = scmp.ne.s32.totalorder %s155, %s158
      %p164 = scmp.eq.s32.totalorder %s28, 0
      %p165 = por %p163, %p164
      %p166 = scmp.ne.s32.totalorder %s155, %s158
      %p167 = scmp.eq.s32.totalorder %s33, 1
      %p168 = por %p166, %p167
      %p169 = scmp.ne.s32.totalorder %s158, %s159
      %p170 = scmp.eq.s32.totalorder %s33, 0
      %p171 = por %p169, %p170
      %p172 = scmp.ne.s32.totalorder %s158, %s159
      %p173 = scmp.eq.s32.totalorder %s34, 1
      %p174 = por %p172, %p173
      %p176 = scmp.ne.s32.totalorder %s159, %s175
      %p177 = scmp.eq.s32.totalorder %s34, 0
      %p178 = por %p176, %p177
      %s179 = ssub.s32 %s35, %s47
      %p180 = scmp.eq.s32.totalorder %s179, 0
      %s182 = sadd.s32 %s181, 1
      %s183 = scalar_select %p180, %s181, %s182
      %p186 = pneg %p180
      %p187 = scmp.eq.s32.totalorder %s28, 1
      %p188 = por %p186, %p187
      %p189 = scmp.ne.s32.totalorder %s181, %s184
      %p190 = scmp.eq.s32.totalorder %s28, 0
      %p191 = por %p189, %p190
      %p192 = scmp.ne.s32.totalorder %s181, %s184
      %p193 = scmp.eq.s32.totalorder %s33, 1
      %p194 = por %p192, %p193
      %p195 = scmp.ne.s32.totalorder %s184, %s185
      %p196 = scmp.eq.s32.totalorder %s33, 0
      %p197 = por %p195, %p196
      %p198 = scmp.ne.s32.totalorder %s184, %s185
      %p199 = scmp.eq.s32.totalorder %s34, 1
      %p200 = por %p198, %p199
      %p202 = scmp.ne.s32.totalorder %s185, %s201
      %p203 = scmp.eq.s32.totalorder %s34, 0
      %p204 = por %p202, %p203
      %s205 = ssub.s32 %s35, %s47
      %p206 = scmp.eq.s32.totalorder %s205, 0
      %s208 = sadd.s32 %s207, 1
      %s209 = scalar_select %p206, %s207, %s208
      %p212 = pneg %p206
      %p213 = scmp.eq.s32.totalorder %s28, 1
      %p214 = por %p212, %p213
      %p215 = scmp.ne.s32.totalorder %s207, %s210
      %p216 = scmp.eq.s32.totalorder %s28, 0
      %p217 = por %p215, %p216
      %p218 = scmp.ne.s32.totalorder %s207, %s210
      %p219 = scmp.eq.s32.totalorder %s33, 1
      %p220 = por %p218, %p219
      %p221 = scmp.ne.s32.totalorder %s210, %s211
      %p222 = scmp.eq.s32.totalorder %s33, 0
      %p223 = por %p221, %p222
      %p224 = scmp.ne.s32.totalorder %s210, %s211
      %p225 = scmp.eq.s32.totalorder %s34, 1
      %p226 = por %p224, %p225
      %p228 = scmp.ne.s32.totalorder %s211, %s227
      %p229 = scmp.eq.s32.totalorder %s34, 0
      %p230 = por %p228, %p229
      %p231 = scmp.le.s32.totalorder 1, %s28
      %p232 = scmp.lt.s32.totalorder %s28, 3
      %p233 = pnand %p231, %p232
      %p234 = pneg %p233
      // Predicated region
      $region9: #{tpu_custom_call.1} parent=5 // pred_check
        _
      $region10: #{tpu_custom_call.1} parent=5 // pred_check_branch
        %236 = sbr.rel (%p233) target = $region12
      $region11: #{tpu_custom_call.1} parent=5 // pred_region
        %s237 = ssub.s32 %s28, 1
        // Predicated region
        $region13: #{tpu_custom_call.1} parent=11 // pred_check
          %p238 = pneg %p115
        $region14: #{tpu_custom_call.1} parent=11 // pred_check_branch
          %240 = sbr.rel (%p238) target = $region16
        $region15: #{tpu_custom_call.1} parent=11 // pred_region
          %s242 = ssub.s32 512, 512
          %243 = vsyncadd [#allocation10], %s242
          %s244 = sshll.u32 [#allocation11], 4
          %s245 = int_to_ptr.vmem [resolvable:$true] %s244
          %250 = dma.hbm_to_vmem [thread:$0]  %s2, 512, %s245, [#allocation10], 128, 128, 8
        $region16: #{tpu_custom_call.1} parent=11 // pred_fallthru
          _
      $region12: #{tpu_custom_call.1} parent=5 // pred_fallthru
        _
      %p251 = scmp.lt.s32.totalorder %s28, 2
      // Predicated region
      $region17: #{tpu_custom_call.1} parent=5 // pred_check
        %p252 = pneg %p251
      $region18: #{tpu_custom_call.1} parent=5 // pred_check_branch
        %254 = sbr.rel (%p252) target = $region20
      $region19: #{tpu_custom_call.1} parent=5 // pred_region
        // Predicated region
        $region21: #{tpu_custom_call.1} parent=19 // pred_check
          %p255 = pneg %p60
        $region22: #{tpu_custom_call.1} parent=19 // pred_check_branch
          %257 = sbr.rel (%p255) target = $region24
        $region23: #{tpu_custom_call.1} parent=19 // pred_region
          %s258 = sand.u32 %s50, 1
          %s259 = scalar_lea.sflag [#allocation7], %s258
          %s260 = sand.u32 %s50, 1
          %s261 = smul.addr %s260, 8
          %s262 = scalar_lea.vmem [#allocation6], %s261
          %s264 = ssub.s32 128, 128
          %265 = vsyncadd %s259, %s264
          %s266 = smul.addr %s35, 128
          %s267 = scalar_lea.hbm %s0, %s266
          %s269 = sshll.u32 %s262, 4
          %s270 = int_to_ptr.vmem [resolvable:$true] %s269
          %272 = dma.hbm_to_vmem [thread:$0]  %s267, 128, %s270, %s259
        $region24: #{tpu_custom_call.1} parent=19 // pred_fallthru
          _
        // Predicated region
        $region25: #{tpu_custom_call.1} parent=19 // pred_check
          %p273 = pneg %p88
        $region26: #{tpu_custom_call.1} parent=19 // pred_check_branch
          %275 = sbr.rel (%p273) target = $region28
        $region27: #{tpu_custom_call.1} parent=19 // pred_region
          %s276 = sand.u32 %s28, 1
          %s277 = scalar_lea.sflag [#allocation10], %s276
          %s278 = sand.u32 %s78, 1
          %s279 = smul.addr %s278, 16
          %s280 = scalar_lea.vmem [#allocation9], %s279
          %s281 = smul.u32 2, %s36
          %s283 = ssub.s32 256, 256
          %284 = vsyncadd %s277, %s283
          %s285 = smul.addr %s35, 2
          %s286 = sadd.s32 %s281, %s285
          %s287 = smul.addr %s286, 128
          %s288 = scalar_lea.hbm %s1, %s287
          %s289 = sshll.u32 %s280, 4
          %s290 = int_to_ptr.vmem [resolvable:$true] %s289
          %295 = dma.hbm_to_vmem [thread:$0]  %s288, 256, %s290, %s277, 128, 128, 8
        $region28: #{tpu_custom_call.1} parent=19 // pred_fallthru
          _
        // Predicated region
        $region29: #{tpu_custom_call.1} parent=19 // pred_check
          %p296 = pneg %p137
        $region30: #{tpu_custom_call.1} parent=19 // pred_check_branch
          %298 = sbr.rel (%p296) target = $region32
        $region31: #{tpu_custom_call.1} parent=19 // pred_region
          %p299 = scmp.lt.s32.totalorder %s35, 1
          %s300 = scalar_select %p299, %s35, 1
          %p301 = scmp.lt.s32.totalorder %s36, 0
          %s302 = scalar_select %p301, %s36, 0
          %s303 = sadd.s32 %s302, %s300
          %s304 = smul.addr %s303, 2
          %s305 = scalar_lea.vmem %s3, %s304
        $region32: #{tpu_custom_call.1} parent=19 // pred_fallthru
          _
        // Predicated region
        $region33: #{tpu_custom_call.1} parent=19 // pred_check
          %p306 = pneg %p165
        $region34: #{tpu_custom_call.1} parent=19 // pred_check_branch
          %308 = sbr.rel (%p306) target = $region36
        $region35: #{tpu_custom_call.1} parent=19 // pred_region
          %s309 = sand.u32 %s155, 1
          %s310 = scalar_lea.sflag [#allocation13], %s309
          %s311 = sand.u32 %s155, 1
          %s312 = smul.addr %s311, 16
          %s313 = scalar_lea.vmem [#allocation12], %s312
          %s314 = smul.u32 2, %s36
          %s316 = ssub.s32 256, 256
          %317 = vsyncadd %s310, %s316
          %s318 = smul.addr %s35, 2
          %s319 = sadd.s32 %s314, %s318
          %s320 = smul.addr %s319, 128
          %s321 = scalar_lea.hbm %s4, %s320
          %s322 = sshll.u32 %s313, 4
          %s323 = int_to_ptr.vmem [resolvable:$true] %s322
          %328 = dma.hbm_to_vmem [thread:$0]  %s321, 256, %s323, %s310, 128, 128, 8
        $region36: #{tpu_custom_call.1} parent=19 // pred_fallthru
          _
      $region20: #{tpu_custom_call.1} parent=5 // pred_fallthru
        _
      %p329 = scmp.le.s32.totalorder 1, %s28
      %p330 = scmp.lt.s32.totalorder %s28, 3
      %p331 = pnand %p329, %p330
      %p332 = pneg %p331
      // Predicated region
      $region37: #{tpu_custom_call.1} parent=5 // pred_check
        _
      $region38: #{tpu_custom_call.1} parent=5 // pred_check_branch
        %334 = sbr.rel (%p331) target = $region40
      $region39: #{tpu_custom_call.1} parent=5 // pred_region
        %s335 = ssub.s32 %s28, 1
        %s336 = sand.u32 %s53, 1
        %s337 = scalar_lea.sflag [#allocation7], %s336
        %s338 = sand.u32 %s53, 1
        %s339 = smul.addr %s338, 8
        %s340 = scalar_lea.vmem [#allocation6], %s339
        // Predicated region
        $region41: #{tpu_custom_call.1} parent=39 // pred_check
          %p341 = pneg %p66
        $region42: #{tpu_custom_call.1} parent=39 // pred_check_branch
          %343 = sbr.rel (%p341) target = $region44
        $region43: #{tpu_custom_call.1} parent=39 // pred_region
          %344 = dma.done %s337, 128
        $region44: #{tpu_custom_call.1} parent=39 // pred_fallthru
          _
        %s345 = sand.u32 %s33, 1
        %s346 = scalar_lea.sflag [#allocation10], %s345
        %s347 = sand.u32 %s81, 1
        %s348 = smul.addr %s347, 16
        %s349 = scalar_lea.vmem [#allocation9], %s348
        // Predicated region
        $region45: #{tpu_custom_call.1} parent=39 // pred_check
          %p350 = pneg %p94
        $region46: #{tpu_custom_call.1} parent=39 // pred_check_branch
          %352 = sbr.rel (%p350) target = $region48
        $region47: #{tpu_custom_call.1} parent=39 // pred_region
          %353 = dma.done %s346, 256
        $region48: #{tpu_custom_call.1} parent=39 // pred_fallthru
          _
        // Predicated region
        $region49: #{tpu_custom_call.1} parent=39 // pred_check
          %p354 = pneg %p115
        $region50: #{tpu_custom_call.1} parent=39 // pred_check_branch
          %356 = sbr.rel (%p354) target = $region52
        $region51: #{tpu_custom_call.1} parent=39 // pred_region
          %357 = dma.done [#allocation10], 512
        $region52: #{tpu_custom_call.1} parent=39 // pred_fallthru
          _
        %s358 = sand.u32 %s158, 1
        %s359 = scalar_lea.sflag [#allocation13], %s358
        %s360 = sand.u32 %s158, 1
        %s361 = smul.addr %s360, 16
        %s362 = scalar_lea.vmem [#allocation12], %s361
        // Predicated region
        $region53: #{tpu_custom_call.1} parent=39 // pred_check
          %p363 = pneg %p171
        $region54: #{tpu_custom_call.1} parent=39 // pred_check_branch
          %365 = sbr.rel (%p363) target = $region56
        $region55: #{tpu_custom_call.1} parent=39 // pred_region
          %366 = dma.done %s359, 256
        $region56: #{tpu_custom_call.1} parent=39 // pred_fallthru
          _
        %s367 = sand.u32 %s53, 1
        %s368 = scalar_lea.sflag [#allocation7], %s367
        %s369 = sand.u32 %s53, 1
        %s370 = smul.addr %s369, 8
        %s371 = scalar_lea.vmem [#allocation6], %s370
        %p372 = pneg %p66
        %p373 = pneg %p63
        %s374 = sand.u32 %s33, 1
        %s375 = scalar_lea.sflag [#allocation10], %s374
        %s376 = sand.u32 %s81, 1
        %s377 = smul.addr %s376, 16
        %s378 = scalar_lea.vmem [#allocation9], %s377
        %p379 = pneg %p94
        %p380 = pneg %p91
        %p381 = pneg %p115
        %p382 = pneg %p112
        %p383 = scmp.lt.s32.totalorder %s37, 1
        %s384 = scalar_select %p383, %s37, 1
        %p385 = scmp.lt.s32.totalorder %s38, 0
        %s386 = scalar_select %p385, %s38, 0
        %s387 = sadd.s32 %s386, %s384
        %s388 = smul.addr %s387, 2
        %s389 = scalar_lea.vmem %s3, %s388
        %p390 = pneg %p143
        %p391 = pneg %p140
        %s392 = sand.u32 %s158, 1
        %s393 = scalar_lea.sflag [#allocation13], %s392
        %s394 = sand.u32 %s158, 1
        %s395 = smul.addr %s394, 16
        %s396 = scalar_lea.vmem [#allocation12], %s395
        %p397 = pneg %p171
        %p398 = pneg %p168
        %p399 = pneg %p197
        %p400 = pneg %p194
        %s401 = sand.u32 %s184, 1
        %s402 = scalar_lea.sflag [#allocation8], %s401
        %s403 = sand.u32 %s184, 1
        %s404 = smul.addr %s403, 8
        %s405 = scalar_lea.vmem [#allocation14], %s404
        %p406 = pneg %p223
        %p407 = pneg %p220
        %s408 = sand.u32 %s210, 1
        %s409 = scalar_lea.sflag [#allocation16], %s408
        %s410 = sand.u32 %s210, 1
        %s411 = smul.addr %s410, 8
        %s412 = scalar_lea.vmem [#allocation15], %s411
        %s413 = smul.u32 2, %s38
        %p414 = scmp.lt.s32.totalorder %s37, 1
        %s415 = scalar_select %p414, %s37, 1
        %p416 = scmp.lt.s32.totalorder %s38, 0
        %s417 = scalar_select %p416, %s38, 0
        %s418 = sadd.s32 %s417, %s415
        %s419 = smul.addr %s418, 2
        %s420 = scalar_lea.vmem %s3, %s419
        %s421 = smul.u32 2, %s38
        %p424 = scmp.eq.s32.totalorder %s38, 0
        // Predicated region
        $region57: #{tpu_custom_call.1} parent=39 // pred_check
          %p425 = pneg %p424
        $region58: #{tpu_custom_call.1} parent=39 // pred_check_branch
          %427 = sbr.rel (%p425) target = $region60
        $region59: #{tpu_custom_call.1} parent=39 // pred_region
          %v428 = vld [vmem:[%s340] sm:$0xff]
          %v429 = vld [vmem:[#allocation11] sm:$0xff]
          %v430 = vld [vmem:[#allocation11 + $0x8] sm:$0xff]
          %v431 = vld [vmem:[#allocation11 + $0x10] sm:$0xff]
          %v432 = vld [vmem:[#allocation11 + $0x18] sm:$0xff]
          %vm433 = vcmask 261120
          %v435 = vsel %vm433, %v428, 0
          %437 = vmatprep.subr.mxu0 0.0
          %438 = vmatpush1.msra.mxu0 %v429
          %439 = vmatprep.subr.mxu0 0.0
          %440 = vmatpush1.msra.mxu0 %v430
          %441 = vmatprep.subr.mxu0 0.0
          %442 = vmatpush1.msra.mxu0 %v431
          %443 = vmatprep.subr.mxu0 0.0
          %444 = vmatpush1.msra.mxu0 %v432
          %445 = vmatprep.subr.mxu0 0.0
          %446 = vmatpush1.msra.mxu0 0.0
          %447 = vmatprep.subr.mxu0 0.0
          %448 = vmatpush1.msra.mxu0 0.0
          %449 = vmatprep.subr.mxu0 0.0
          %450 = vmatpush1.msra.mxu0 0.0
          %451 = vmatprep.subr.mxu0 0.0
          %452 = vmatpush1.msra.mxu0 0.0
          %453 = vmatprep.subr.mxu0 0.0
          %454 = vmatpush1.msra.mxu0 0.0
          %455 = vmatprep.subr.mxu0 0.0
          %456 = vmatpush1.msra.mxu0 0.0
          %457 = vmatprep.subr.mxu0 0.0
          %458 = vmatpush1.msra.mxu0 0.0
          %459 = vmatprep.subr.mxu0 0.0
          %460 = vmatpush1.msra.mxu0 0.0
          %461 = vmatprep.subr.mxu0 0.0
          %462 = vmatpush1.msra.mxu0 0.0
          %463 = vmatprep.subr.mxu0 0.0
          %464 = vmatpush1.msra.mxu0 0.0
          %465 = vmatprep.subr.mxu0 0.0
          %466 = vmatpush1.msra.mxu0 0.0
          %467 = vmatprep.subr.mxu0 0.0
          %468 = vmatpush1.msra.mxu0 0.0
          %469 = vmatprep.subr.mxu0 0.0
          %470 = vmatpush1.msra.mxu0 0.0
          %471 = vmatprep.subr.mxu0 0.0
          %472 = vmatpush1.msra.mxu0 0.0
          %473 = vmatprep.subr.mxu0 0.0
          %474 = vmatpush1.msra.mxu0 0.0
          %475 = vmatprep.subr.mxu0 0.0
          %476 = vmatpush1.msra.mxu0 0.0
          %477 = vmatprep.subr.mxu0 0.0
          %478 = vmatpush1.msra.mxu0 0.0
          %479 = vmatprep.subr.mxu0 0.0
          %480 = vmatpush1.msra.mxu0 0.0
          %481 = vmatprep.subr.mxu0 0.0
          %482 = vmatpush1.msra.mxu0 0.0
          %483 = vmatprep.subr.mxu0 0.0
          %484 = vmatpush1.msra.mxu0 0.0
          %485 = vmatprep.subr.mxu0 0.0
          %486 = vmatpush1.msra.mxu0 0.0
          %487 = vmatprep.subr.mxu0 0.0
          %488 = vmatpush1.msra.mxu0 0.0
          %489 = vmatprep.subr.mxu0 0.0
          %490 = vmatpush1.msra.mxu0 0.0
          %491 = vmatprep.subr.mxu0 0.0
          %492 = vmatpush1.msra.mxu0 0.0
          %493 = vmatprep.subr.mxu0 0.0
          %494 = vmatpush1.msra.mxu0 0.0
          %495 = vmatprep.subr.mxu0 0.0
          %496 = vmatpush1.msra.mxu0 0.0
          %497 = vmatprep.subr.mxu0 0.0
          %498 = vmatpush1.msra.mxu0 0.0
          %499 = vmatprep.subr.mxu0 0.0
          %500 = vmatpush1.msra.mxu0 0.0
          %501 = vmatprep.mubr.f32.mxu0 0.0
          %502 = vmatmul.mubr.f32.gmra.mrb[0].mxu0 %v435
          %v503 = vpop.f32.mrb[0].mxu0
          %v504 = vadd.f32 0.0, %v503
          %v505 = vpop.f32.mrb[0].mxu0
          %506 = vdwg.mxu0
          %507 = vst.msk [vmem:[#allocation2] sm:$0xff] %vm433, %v504
          %vm508 = vcmask 7168
          %509 = vst.msk [vmem:[#allocation3] sm:$0xff] %vm508, -inf
          %510 = vst.msk [vmem:[#allocation4] sm:$0xff] %vm508, 0.0
          %511 = vst.msk [vmem:[#allocation5] sm:$0xff] %vm433, 0.0
        $region60: #{tpu_custom_call.1} parent=39 // pred_fallthru
          _
        %v512 = vld [vmem:[%s349] sm:$0xff]
        %v513 = vld [vmem:[%s349 + $0x8] sm:$0xff]
        %v514 = vld [vmem:[%s362] sm:$0xff]
        %v515 = vld [vmem:[%s362 + $0x8] sm:$0xff]
        %v516 = vld [vmem:[%s420] sm:$0x3]
        %v517 = vld [vmem:[#allocation2] sm:$0xff]
        %vm518 = vcmask 261120
        %v520 = vsel %vm518, %v517, 0
        %v523 = vsel %vm518, %v512, 0
        %v526 = vsel %vm518, %v513, 0
        %528 = vmatprep.subr.mxu0 0.0
        %529 = vmatpush1.xpose.msra.mxu0 %v523
        %530 = vmatprep.subr.mxu0 0.0
        %531 = vmatpush1.xpose.msra.mxu0 %v526
        %532 = vmatprep.subr.mxu0 0.0
        %533 = vmatpush1.xpose.msra.mxu0 0.0
        %534 = vmatprep.subr.mxu0 0.0
        %535 = vmatpush1.xpose.msra.mxu0 0.0
        %536 = vmatprep.subr.mxu0 0.0
        %537 = vmatpush1.xpose.msra.mxu0 0.0
        %538 = vmatprep.subr.mxu0 0.0
        %539 = vmatpush1.xpose.msra.mxu0 0.0
        %540 = vmatprep.subr.mxu0 0.0
        %541 = vmatpush1.xpose.msra.mxu0 0.0
        %542 = vmatprep.subr.mxu0 0.0
        %543 = vmatpush1.xpose.msra.mxu0 0.0
        %544 = vmatprep.subr.mxu0 0.0
        %545 = vmatpush1.xpose.msra.mxu0 0.0
        %546 = vmatprep.subr.mxu0 0.0
        %547 = vmatpush1.xpose.msra.mxu0 0.0
        %548 = vmatprep.subr.mxu0 0.0
        %549 = vmatpush1.xpose.msra.mxu0 0.0
        %550 = vmatprep.subr.mxu0 0.0
        %551 = vmatpush1.xpose.msra.mxu0 0.0
        %552 = vmatprep.subr.mxu0 0.0
        %553 = vmatpush1.xpose.msra.mxu0 0.0
        %554 = vmatprep.subr.mxu0 0.0
        %555 = vmatpush1.xpose.msra.mxu0 0.0
        %556 = vmatprep.subr.mxu0 0.0
        %557 = vmatpush1.xpose.msra.mxu0 0.0
        %558 = vmatprep.subr.mxu0 0.0
        %559 = vmatpush1.xpose.msra.mxu0 0.0
        %560 = vmatprep.subr.mxu0 0.0
        %561 = vmatpush1.xpose.msra.mxu0 0.0
        %562 = vmatprep.subr.mxu0 0.0
        %563 = vmatpush1.xpose.msra.mxu0 0.0
        %564 = vmatprep.subr.mxu0 0.0
        %565 = vmatpush1.xpose.msra.mxu0 0.0
        %566 = vmatprep.subr.mxu0 0.0
        %567 = vmatpush1.xpose.msra.mxu0 0.0
        %568 = vmatprep.subr.mxu0 0.0
        %569 = vmatpush1.xpose.msra.mxu0 0.0
        %570 = vmatprep.subr.mxu0 0.0
        %571 = vmatpush1.xpose.msra.mxu0 0.0
        %572 = vmatprep.subr.mxu0 0.0
        %573 = vmatpush1.xpose.msra.mxu0 0.0
        %574 = vmatprep.subr.mxu0 0.0
        %575 = vmatpush1.xpose.msra.mxu0 0.0
        %576 = vmatprep.subr.mxu0 0.0
        %577 = vmatpush1.xpose.msra.mxu0 0.0
        %578 = vmatprep.subr.mxu0 0.0
        %579 = vmatpush1.xpose.msra.mxu0 0.0
        %580 = vmatprep.subr.mxu0 0.0
        %581 = vmatpush1.xpose.msra.mxu0 0.0
        %582 = vmatprep.subr.mxu0 0.0
        %583 = vmatpush1.xpose.msra.mxu0 0.0
        %584 = vmatprep.subr.mxu0 0.0
        %585 = vmatpush1.xpose.msra.mxu0 0.0
        %586 = vmatprep.subr.mxu0 0.0
        %587 = vmatpush1.xpose.msra.mxu0 0.0
        %588 = vmatprep.subr.mxu0 0.0
        %589 = vmatpush1.xpose.msra.mxu0 0.0
        %590 = vmatprep.subr.mxu0 0.0
        %591 = vmatpush1.xpose.msra.mxu0 0.0
        %592 = vmatprep.mubr.f32.mxu0 0.0
        %593 = vmatmul.mubr.f32.gmra.mrb[0].mxu0 %v520
        %v594 = vpop.f32.mrb[0].mxu0
        %v595 = vadd.f32 0.0, %v594
        %v596 = vpop.f32.mrb[0].mxu0
        %597 = vdwg.mxu0
        %vm598 = vnez %v516
        %v599 = vsel %vm598, 16843009, 0
        %v600 = vunpack.c.0.s8 %v599
        %vm601 = vcmp.ne.s32.totalorder %v600, 0
        %v602 = vsel %vm601, %v595, -1e+30
        %v603 = vld [vmem:[#allocation3] sm:$0xff]
        %vm604 = vcmask 130048
        %v605 = vsel %vm604, %v602, -inf
        %606 = vmax.xlane.f32.xlu0 %v605
        %v607 = vpop.xlane.xlu0 %606
        %v608 = vmax.f32 %v603, %v607
        %v609 = vsub.f32 %v603, %v608
        %v610 = vmul.f32 %v609, 1.442695
        %v611 = vpow.pop %v610
        %613 = vset.pattern.permute.xlu0 0
        %614 = vperm.xlu0 %613, %v608
        %v615 = vpop.permute.xlu0 %614
        %v617 = vsub.f32 %v602, %v615
        %v618 = vmul.f32 %v617, 1.442695
        %v619 = vpow.pop %v618
        %v620 = vld [vmem:[#allocation4] sm:$0xff]
        %v621 = vmul.f32 %v611, %v620
        %v622 = vsel %vm604, %v619, 0.0
        %623 = vadd.xlane.f32.xlu0 %v622
        %v624 = vpop.xlane.xlu0 %623
        %v625 = vadd.f32 %v621, %v624
        %vm626 = vcmask 7168
        %627 = vst.msk [vmem:[#allocation4] sm:$0xff] %vm626, %v625
        %v628 = vld [vmem:[#allocation5] sm:$0xff]
        %630 = vset.pattern.permute.xlu0 0
        %631 = vperm.xlu0 %630, %v611
        %v632 = vpop.permute.xlu0 %631
        %v634 = vmul.f32 %v632, %v628
        %v636 = vsel %vm604, %v619, 0
        %638 = vmatprep.subr.mxu0 0.0
        %639 = vmatpush1.msra.mxu0 %v514
        %640 = vmatprep.subr.mxu0 0.0
        %641 = vmatpush1.msra.mxu0 %v515
        %642 = vmatprep.subr.mxu0 0.0
        %643 = vmatpush1.msra.mxu0 0.0
        %644 = vmatprep.subr.mxu0 0.0
        %645 = vmatpush1.msra.mxu0 0.0
        %646 = vmatprep.subr.mxu0 0.0
        %647 = vmatpush1.msra.mxu0 0.0
        %648 = vmatprep.subr.mxu0 0.0
        %649 = vmatpush1.msra.mxu0 0.0
        %650 = vmatprep.subr.mxu0 0.0
        %651 = vmatpush1.msra.mxu0 0.0
        %652 = vmatprep.subr.mxu0 0.0
        %653 = vmatpush1.msra.mxu0 0.0
        %654 = vmatprep.subr.mxu0 0.0
        %655 = vmatpush1.msra.mxu0 0.0
        %656 = vmatprep.subr.mxu0 0.0
        %657 = vmatpush1.msra.mxu0 0.0
        %658 = vmatprep.subr.mxu0 0.0
        %659 = vmatpush1.msra.mxu0 0.0
        %660 = vmatprep.subr.mxu0 0.0
        %661 = vmatpush1.msra.mxu0 0.0
        %662 = vmatprep.subr.mxu0 0.0
        %663 = vmatpush1.msra.mxu0 0.0
        %664 = vmatprep.subr.mxu0 0.0
        %665 = vmatpush1.msra.mxu0 0.0
        %666 = vmatprep.subr.mxu0 0.0
        %667 = vmatpush1.msra.mxu0 0.0
        %668 = vmatprep.subr.mxu0 0.0
        %669 = vmatpush1.msra.mxu0 0.0
        %670 = vmatprep.subr.mxu0 0.0
        %671 = vmatpush1.msra.mxu0 0.0
        %672 = vmatprep.subr.mxu0 0.0
        %673 = vmatpush1.msra.mxu0 0.0
        %674 = vmatprep.subr.mxu0 0.0
        %675 = vmatpush1.msra.mxu0 0.0
        %676 = vmatprep.subr.mxu0 0.0
        %677 = vmatpush1.msra.mxu0 0.0
        %678 = vmatprep.subr.mxu0 0.0
        %679 = vmatpush1.msra.mxu0 0.0
        %680 = vmatprep.subr.mxu0 0.0
        %681 = vmatpush1.msra.mxu0 0.0
        %682 = vmatprep.subr.mxu0 0.0
        %683 = vmatpush1.msra.mxu0 0.0
        %684 = vmatprep.subr.mxu0 0.0
        %685 = vmatpush1.msra.mxu0 0.0
        %686 = vmatprep.subr.mxu0 0.0
        %687 = vmatpush1.msra.mxu0 0.0
        %688 = vmatprep.subr.mxu0 0.0
        %689 = vmatpush1.msra.mxu0 0.0
        %690 = vmatprep.subr.mxu0 0.0
        %691 = vmatpush1.msra.mxu0 0.0
        %692 = vmatprep.subr.mxu0 0.0
        %693 = vmatpush1.msra.mxu0 0.0
        %694 = vmatprep.subr.mxu0 0.0
        %695 = vmatpush1.msra.mxu0 0.0
        %696 = vmatprep.subr.mxu0 0.0
        %697 = vmatpush1.msra.mxu0 0.0
        %698 = vmatprep.subr.mxu0 0.0
        %699 = vmatpush1.msra.mxu0 0.0
        %700 = vmatprep.subr.mxu0 0.0
        %701 = vmatpush1.msra.mxu0 0.0
        %702 = vmatprep.mubr.f32.mxu0 0.0
        %703 = vmatmul.mubr.f32.gmra.mrb[0].mxu0 %v636
        %v704 = vpop.f32.mrb[0].mxu0
        %v705 = vadd.f32 0.0, %v704
        %v706 = vpop.f32.mrb[0].mxu0
        %707 = vdwg.mxu0
        %v708 = vadd.f32 %v634, %v705
        %709 = vst.msk [vmem:[#allocation5] sm:$0xff] %vm518, %v708
        %710 = vst.msk [vmem:[#allocation3] sm:$0xff] %vm626, %v608
        %711 = vst.msk [vmem:[%s412] sm:$0xff] %vm604, %v619
        // Predicated region
        $region61: #{tpu_custom_call.1} parent=39 // pred_check
          %p712 = pneg %p424
        $region62: #{tpu_custom_call.1} parent=39 // pred_check_branch
          %714 = sbr.rel (%p712) target = $region64
        $region63: #{tpu_custom_call.1} parent=39 // pred_region
          %v715 = vld [vmem:[#allocation4] sm:$0xff]
          %v716 = vrcp.pop %v715
          %v717 = vld [vmem:[#allocation5] sm:$0xff]
          %719 = vset.pattern.permute.xlu0 0
          %720 = vperm.xlu0 %719, %v716
          %v721 = vpop.permute.xlu0 %720
          %v723 = vmul.f32 %v717, %v721
          %724 = vst.msk [vmem:[%s405] sm:$0xff] %vm518, %v723
          %v725 = vld [vmem:[%s412] sm:$0xff]
          %v726 = vmul.f32 %v725, %v721
          %727 = vst.msk [vmem:[%s412] sm:$0xff] %vm604, %v726
        $region64: #{tpu_custom_call.1} parent=39 // pred_fallthru
          _
        %s728 = sand.u32 %s184, 1
        %s729 = scalar_lea.sflag [#allocation8], %s728
        %s730 = sand.u32 %s184, 1
        %s731 = smul.addr %s730, 8
        %s732 = scalar_lea.vmem [#allocation14], %s731
        %s733 = sand.u32 %s210, 1
        %s734 = scalar_lea.sflag [#allocation16], %s733
        %s735 = sand.u32 %s210, 1
        %s736 = smul.addr %s735, 8
        %s737 = scalar_lea.vmem [#allocation15], %s736
        // Predicated region
        $region65: #{tpu_custom_call.1} parent=39 // pred_check
          %p738 = pneg %p194
        $region66: #{tpu_custom_call.1} parent=39 // pred_check_branch
          %740 = sbr.rel (%p738) target = $region68
        $region67: #{tpu_custom_call.1} parent=39 // pred_region
          %s742 = ssub.s32 128, 128
          %743 = vsyncadd %s729, %s742
          %s744 = smul.addr %s37, 128
          %s745 = scalar_lea.hbm %s5, %s744
          %s747 = sshll.u32 %s732, 4
          %s748 = int_to_ptr.vmem [resolvable:$true] %s747
          %750 = dma.vmem_to_hbm [thread:$0]  %s748, 128, %s745, %s729
        $region68: #{tpu_custom_call.1} parent=39 // pred_fallthru
          _
        // Predicated region
        $region69: #{tpu_custom_call.1} parent=39 // pred_check
          %p751 = pneg %p220
        $region70: #{tpu_custom_call.1} parent=39 // pred_check_branch
          %753 = sbr.rel (%p751) target = $region72
        $region71: #{tpu_custom_call.1} parent=39 // pred_region
          %s755 = ssub.s32 128, 128
          %756 = vsyncadd %s734, %s755
          %s757 = smul.addr %s37, 128
          %s758 = scalar_lea.hbm %s6, %s757
          %s760 = sshll.u32 %s737, 4
          %s761 = int_to_ptr.vmem [resolvable:$true] %s760
          %763 = dma.vmem_to_hbm [thread:$0]  %s761, 128, %s758, %s734
        $region72: #{tpu_custom_call.1} parent=39 // pred_fallthru
          _
      $region40: #{tpu_custom_call.1} parent=5 // pred_fallthru
        _
      %p764 = scmp.le.s32.totalorder 2, %s28
      // Predicated region
      $region73: #{tpu_custom_call.1} parent=5 // pred_check
        %p765 = pneg %p764
      $region74: #{tpu_custom_call.1} parent=5 // pred_check_branch
        %767 = sbr.rel (%p765) target = $region76
      $region75: #{tpu_custom_call.1} parent=5 // pred_region
        %s768 = ssub.s32 %s28, 2
        // Predicated region
        $region77: #{tpu_custom_call.1} parent=75 // pred_check
          %p769 = pneg %p200
        $region78: #{tpu_custom_call.1} parent=75 // pred_check_branch
          %771 = sbr.rel (%p769) target = $region80
        $region79: #{tpu_custom_call.1} parent=75 // pred_region
          %s772 = sand.u32 %s185, 1
          %s773 = scalar_lea.sflag [#allocation8], %s772
          %s774 = sand.u32 %s185, 1
          %s775 = smul.addr %s774, 8
          %s776 = scalar_lea.vmem [#allocation14], %s775
          %777 = dma.done %s773, 128
        $region80: #{tpu_custom_call.1} parent=75 // pred_fallthru
          _
        // Predicated region
        $region81: #{tpu_custom_call.1} parent=75 // pred_check
          %p778 = pneg %p226
        $region82: #{tpu_custom_call.1} parent=75 // pred_check_branch
          %780 = sbr.rel (%p778) target = $region84
        $region83: #{tpu_custom_call.1} parent=75 // pred_region
          %s781 = sand.u32 %s211, 1
          %s782 = scalar_lea.sflag [#allocation16], %s781
          %s783 = sand.u32 %s211, 1
          %s784 = smul.addr %s783, 8
          %s785 = scalar_lea.vmem [#allocation15], %s784
          %786 = dma.done %s782, 128
        $region84: #{tpu_custom_call.1} parent=75 // pred_fallthru
          _
      $region76: #{tpu_custom_call.1} parent=5 // pred_fallthru
        _
    $region6: #{tpu_custom_call.1} parent=1 // loop_footer
      %s32 = sadd.s32 1, %s28
    $region7: #{tpu_custom_call.1} parent=1 // loop_footer_branch
      %27 = sbr.rel target = $region3
    $region8: #{tpu_custom_call.1} parent=1 // loop_exit
      _
    %787 = vsyncpa [#allocation7], 1
    %s788 = scalar_lea.sflag [#allocation7], 1
    %789 = vsyncpa %s788, 1
    %790 = vsyncpa [#allocation10], 1
    %s791 = scalar_lea.sflag [#allocation10], 1
    %792 = vsyncpa %s791, 1
    %793 = vsyncpa [#allocation13], 1
    %s794 = scalar_lea.sflag [#allocation13], 1
    %795 = vsyncpa %s794, 1
    %796 = vsyncpa [#allocation8], 1
    %s797 = scalar_lea.sflag [#allocation8], 1
    %798 = vsyncpa %s797, 1
    %799 = vsyncpa [#allocation16], 1
    %s800 = scalar_lea.sflag [#allocation16], 1
    %801 = vsyncpa %s800, 1

</llo_original>
